<compile_context>
chip_gen: v7x
topology: tpu7x:2x2x1
jax: 0.10.0
libtpu: 0.0.40
codegen_flags: <defaults>
</compile_context>

<pallas_src>
import functools
import math

import jax
import jax.numpy as jnp
from jax.experimental import pallas as pl
from jax.experimental.pallas import tpu as pltpu


_POS_VMEM_BUDGET_BYTES = 4 * 1024 * 1024   # keep whole pos table VMEM-resident up to this
_IDS_SMEM_BUDGET_BYTES = 512 * 1024        # token-id table kept in SMEM via scalar prefetch
_MAX_GATHER_ROWS = 512                     # per-grid-step cap on row-gather DMA descriptors
_MAX_FUSED_SEQ = 512                       # beyond this, descriptor count blows up -> fallback


def _cdiv(a, b):
    return -(-a // b)


def _vmem_budgets():
    """(block_budget_bytes, vmem_limit_bytes) tuned per chip generation."""
    cap = 64 * 1024 * 1024
    try:
        cap = int(getattr(pltpu.get_tpu_info(), "vmem_capacity_bytes", cap))
    except Exception:
        pass  # conservative default if the query is unavailable
    if cap <= 64 * 1024 * 1024:                      # v7x-class: 64 MiB physical VMEM
        return 4 * 1024 * 1024, 48 * 1024 * 1024
    return 4 * 1024 * 1024, 64 * 1024 * 1024         # v5e / v6e: 128 MiB physical VMEM


def _layernorm_scaled(x, a, b, *, eps, inv_d, inv_dm1):
    """Torch-style LayerNorm (unbiased std, eps added to std); a/b pre-scaled by sqrt(D).

    Single traversal for the moments: var = (sum(x^2) - sum(x)*mean) / (D - 1).
    Per-row scalars only (shape (..., 1)); reciprocal runs on the EUP slot.
    """
    s1 = jnp.sum(x, axis=-1, keepdims=True)
    s2 = jnp.sum(x * x, axis=-1, keepdims=True)
    mean = s1 * jnp.float32(inv_d)
    var = jnp.maximum((s2 - s1 * mean) * jnp.float32(inv_dm1), jnp.float32(0.0))
    denom = jnp.sqrt(var) + jnp.float32(eps)
    inv = pl.reciprocal(denom, approx=True)
    inv = inv * (jnp.float32(2.0) - denom * inv)      # one Newton step for f32-level accuracy
    return a * ((x - mean) * inv) + b


# --------------------------------------------------------------------------------------
# Fused path: in-kernel embedding-row gather (manual DMA) + pos add + LayerNorm + scale.
# --------------------------------------------------------------------------------------
def _fused_kernel(ids_ref, pos_ref, a_ref, b_ref, tok_hbm, o_ref, gbuf, gsem,
                  *, tile_b, batch, seq, vocab, eps, inv_d, inv_dm1):
    bi = pl.program_id(0)
    b0 = bi * tile_b
    rows = tile_b * seq

    # Row gather: ids live in SMEM (scalar prefetch); each embedding row is a small
    # contiguous HBM->VMEM DMA.  Padding rows of a partial batch tile are clamped to a
    # valid batch row (their outputs are masked out of the store anyway), and token ids
    # are clipped so the DMA bounds check can never fault on bad input ids.
    for rb in range(tile_b):                         # static unroll over batch rows in tile
        bidx = jnp.minimum(b0 + rb, batch - 1)

        @pl.loop(0, seq)
        def _issue(rs, rb=rb, bidx=bidx):
            tok = jnp.clip(ids_ref[bidx * seq + rs], 0, vocab - 1)
            pltpu.make_async_copy(tok_hbm.at[tok], gbuf.at[rb, rs], gsem.at[0]).start()

    # All copies target one semaphore; wait once per issued copy (equal byte counts).
    # These waits overlap with the Pallas pipeline's writeback of the previous output.
    @pl.loop(0, rows)
    def _wait(r):
        pltpu.make_async_copy(tok_hbm.at[0], gbuf.at[0, 0], gsem.at[0]).wait()

    pos = pos_ref[pl.ds(0, seq), :].astype(jnp.float32)       # pos table is VMEM-resident
    x = gbuf[...].astype(jnp.float32) + pos[None, :, :]
    y = _layernorm_scaled(x, a_ref[...], b_ref[...], eps=eps, inv_d=inv_d, inv_dm1=inv_dm1)
    o_ref[...] = y.astype(o_ref.dtype)


def _choose_tile_b(batch, seq, d_model, itemsize, block_budget):
    """Batch rows per grid step: bounded by block budget and gather-descriptor cap."""
    row_bytes = seq * d_model * itemsize
    tile_b = max(1, min(batch,
                        max(1, block_budget // max(row_bytes, 1)),
                        max(1, _MAX_GATHER_ROWS // max(seq, 1))))
    n = _cdiv(batch, tile_b)
    # Megacore (v7x): keep a parallel axis with >= 2 (ideally even) steps when batch > 1.
    if batch > 1 and n < 2:
        tile_b = _cdiv(batch, 2)
    elif n > 1 and n % 2 == 1:
        alt = _cdiv(batch, n + 1)
        if alt >= 1 and _cdiv(batch, alt) % 2 == 0:
            tile_b = alt
    return tile_b


# --------------------------------------------------------------------------------------
# Fallback path: XLA row gather + fused (pos add + LayerNorm + scale) kernel.
# --------------------------------------------------------------------------------------
def _lnorm_kernel(tok_ref, pos_ref, a_ref, b_ref, o_ref, *, eps, inv_d, inv_dm1):
    # tok_ref: (1, tile_s, D); pos_ref: (tile_s, D); a/b: (1, D) f32 (pre-scaled).
    x = tok_ref[...].astype(jnp.float32) + pos_ref[...].astype(jnp.float32)[None, :, :]
    y = _layernorm_scaled(x, a_ref[...], b_ref[...], eps=eps, inv_d=inv_d, inv_dm1=inv_dm1)
    o_ref[...] = y.astype(o_ref.dtype)


def _choose_tile_s(batch, seq, d_model, itemsize, block_budget):
    """Largest sequence tile (multiple of 32 when actually tiling) within the budget."""
    full_bytes = seq * d_model * itemsize
    if full_bytes <= block_budget:
        tile_s = seq
        if batch == 1 and seq > 64:                 # keep >= 2 grid steps for megacore
            half = _cdiv(_cdiv(seq, 2), 32) * 32
            if 0 < half < seq:
                tile_s = half
        return tile_s
    rows = (block_budget // (d_model * itemsize)) // 32 * 32
    rows = max(rows, 32)                            # sublane-safe for f32/bf16/int8
    return min(rows, seq)


# --------------------------------------------------------------------------------------
# Public wrapper.
# --------------------------------------------------------------------------------------
def caption_embeddings(token_ids, tok_table, pos_table, a, b, eps=1e-6):
    """Fused CaptionEmbeddings forward (dropout in eval mode = identity)."""
    assert token_ids.ndim == 2
    batch, seq = token_ids.shape
    vocab, d_model = tok_table.shape
    max_seq_len = pos_table.shape[0]
    assert max_seq_len >= seq and pos_table.shape[1] == d_model
    assert a.shape == (d_model,) and b.shape == (d_model,)
    assert d_model > 1, "unbiased std (ddof=1) requires d_model > 1"

    block_budget, vmem_limit = _vmem_budgets()
    itemsize = tok_table.dtype.itemsize

    # Fold the trailing * sqrt(d_model) into the affine params (hoisted out of the kernel).
    scale = jnp.float32(math.sqrt(d_model))
    a2 = (a.astype(jnp.float32) * scale).reshape(1, d_model)
    b2 = (b.astype(jnp.float32) * scale).reshape(1, d_model)

    out_shape = jax.ShapeDtypeStruct((batch, seq, d_model), tok_table.dtype)
    kernel_kwargs = dict(eps=float(eps), inv_d=1.0 / d_model, inv_dm1=1.0 / (d_model - 1))

    fusable = (
        d_model % 128 == 0                                            # lane-dense stores
        and seq <= _MAX_FUSED_SEQ                                     # bounded DMA count/step
        and max_seq_len * d_model * pos_table.dtype.itemsize <= _POS_VMEM_BUDGET_BYTES
        and 4 * batch * seq <= _IDS_SMEM_BUDGET_BYTES                 # ids fit SMEM
    )

    if fusable:
        tile_b = _choose_tile_b(batch, seq, d_model, itemsize, block_budget)
        grid = (_cdiv(batch, tile_b),)
        ids_flat = token_ids.reshape(-1).astype(jnp.int32)   # 1-D: avoids 2-D SMEM row padding
        return pl.pallas_call(
            functools.partial(_fused_kernel, tile_b=tile_b, batch=batch, seq=seq,
                              vocab=vocab, **kernel_kwargs),
            out_shape=out_shape,
            grid_spec=pltpu.PrefetchScalarGridSpec(
                num_scalar_prefetch=1,
                grid=grid,
                in_specs=[
                    # Whole pos table, constant block index -> DMA'd exactly once.
                    pl.BlockSpec((max_seq_len, d_model), lambda bi, ids: (0, 0)),
                    pl.BlockSpec((1, d_model), lambda bi, ids: (0, 0)),
                    pl.BlockSpec((1, d_model), lambda bi, ids: (0, 0)),
                    # Embedding table stays in HBM; rows are gathered with manual DMAs.
                    pl.BlockSpec(memory_space=pl.ANY),
                ],
                out_specs=pl.BlockSpec((tile_b, seq, d_model), lambda bi, ids: (bi, 0, 0)),
                scratch_shapes=[
                    pltpu.VMEM((tile_b, seq, d_model), tok_table.dtype),
                    pltpu.SemaphoreType.DMA((1,)),
                ],
            ),
            compiler_params=pltpu.CompilerParams(
                dimension_semantics=("parallel",),
                vmem_limit_bytes=vmem_limit,
            ),
        )(ids_flat, pos_table, a2, b2, tok_table)

    # Fallback (non-lane-dense d_model, very long seq, or oversized pos/ids tables):
    # XLA gather feeds a fused pos-add + LayerNorm + scale kernel.  Grid order is
    # (seq_tiles, batch) so the pos block index (si, 0) is constant across the inner
    # batch steps and is not re-DMA'd per batch row.
    tok_emb = jnp.take(tok_table, token_ids, axis=0)          # (batch, seq, d_model)
    pos_emb = pos_table[:seq]                                  # small S*D copy, fallback only
    tile_s = _choose_tile_s(batch, seq, d_model, itemsize, block_budget)
    grid = (_cdiv(seq, tile_s), batch)
    return pl.pallas_call(
        functools.partial(_lnorm_kernel, **kernel_kwargs),
        out_shape=out_shape,
        grid_spec=pltpu.PrefetchScalarGridSpec(
            num_scalar_prefetch=0,
            grid=grid,
            in_specs=[
                pl.BlockSpec((1, tile_s, d_model), lambda si, bi: (bi, si, 0)),
                pl.BlockSpec((tile_s, d_model), lambda si, bi: (si, 0)),
                pl.BlockSpec((1, d_model), lambda si, bi: (0, 0)),
                pl.BlockSpec((1, d_model), lambda si, bi: (0, 0)),
            ],
            out_specs=pl.BlockSpec((1, tile_s, d_model), lambda si, bi: (bi, si, 0)),
        ),
        compiler_params=pltpu.CompilerParams(
            dimension_semantics=("parallel", "parallel"),
            vmem_limit_bytes=vmem_limit,
        ),
    )(tok_emb, pos_emb, a2, b2)


def _reference(token_ids, tok_table, pos_table, a, b, eps=1e-6):
    seq = token_ids.shape[1]
    d_model = tok_table.shape[1]
    x = (tok_table[token_ids] + pos_table[:seq][None, :, :]).astype(jnp.float32)
    mean = jnp.mean(x, axis=-1, keepdims=True)
    std = jnp.sqrt(jnp.var(x, axis=-1, keepdims=True, ddof=1))   # torch .std(): unbiased
    y = a * ((x - mean) / (std + eps)) + b
    return (y * math.sqrt(d_model)).astype(tok_table.dtype)


if __name__ == "__main__":
    key = jax.random.PRNGKey(0)

    # --- main (fused in-kernel gather) path: lane-dense d_model ---
    batch, seq = 2, 8
    vocab_size, max_seq_len, d_model = 32, 16, 128

    k_ids, k_tok, k_pos, k_a, k_b = jax.random.split(key, 5)
    token_ids = jax.random.randint(k_ids, (batch, seq), 0, vocab_size, dtype=jnp.int32)
    tok_table = jax.random.normal(k_tok, (vocab_size, d_model), dtype=jnp.float32)
    pos_table = jax.random.normal(k_pos, (max_seq_len, d_model), dtype=jnp.float32)
    a = 1.0 + 0.1 * jax.random.normal(k_a, (d_model,), dtype=jnp.float32)
    b = 0.1 * jax.random.normal(k_b, (d_model,), dtype=jnp.float32)

    out = jax.block_until_ready(caption_embeddings(token_ids, tok_table, pos_table, a, b))
    ref = _reference(token_ids, tok_table, pos_table, a, b)
    assert out.shape == (batch, seq, d_model)
    err = float(jnp.max(jnp.abs(out - ref)))
    assert err < 5e-3, f"fused path mismatch vs reference: {err}"

    # --- fallback path: non-lane-dense d_model exercises the XLA-gather + LN kernel ---
    d2 = 96
    t2 = jax.random.normal(k_tok, (vocab_size, d2), dtype=jnp.float32)
    p2 = jax.random.normal(k_pos, (max_seq_len, d2), dtype=jnp.float32)
    a2_ = 1.0 + 0.1 * jax.random.normal(k_a, (d2,), dtype=jnp.float32)
    b2_ = 0.1 * jax.random.normal(k_b, (d2,), dtype=jnp.float32)
    out2 = jax.block_until_ready(caption_embeddings(token_ids, t2, p2, a2_, b2_))
    err2 = float(jnp.max(jnp.abs(out2 - _reference(token_ids, t2, p2, a2_, b2_))))
    assert err2 < 5e-3, f"fallback path mismatch vs reference: {err2}"

    print("KERNEL_OK")
</pallas_src>

<mosaic_0001>
module attributes {stable_mosaic.version = 11 : i64} {
  func.func @_fused_kernel(%arg0: i32, %arg1: memref<16xi32, #tpu.memory_space<smem>>, %arg2: memref<16x128xf32, #tpu.memory_space<vmem>>, %arg3: memref<1x128xf32, #tpu.memory_space<vmem>>, %arg4: memref<1x128xf32, #tpu.memory_space<vmem>>, %arg5: memref<32x128xf32, #tpu.memory_space<any>>, %arg6: memref<1x8x128xf32, #tpu.memory_space<vmem>>, %arg7: memref<1x8x128xf32, #tpu.memory_space<vmem>>, %arg8: memref<1x!tpu.dma_semaphore, #tpu.memory_space<semaphore_mem>>) attributes {dimension_semantics = [#tpu.dimension_semantics<parallel>], iteration_bounds = array<i64: 2>, scalar_prefetch = 1 : i64, scratch_operands = 2 : i64, tpu.core_type = #tpu.core_type<tc>, window_params = [{pipeline_mode = #tpu.pipeline_mode<synchronous>, transform_indices = @transform_0, window_bounds = array<i64: 16, 128>}, {pipeline_mode = #tpu.pipeline_mode<synchronous>, transform_indices = @transform_1, window_bounds = array<i64: 1, 128>}, {pipeline_mode = #tpu.pipeline_mode<synchronous>, transform_indices = @transform_2, window_bounds = array<i64: 1, 128>}, {}, {transform_indices = @transform_4, window_bounds = array<i64: 1, 8, 128>}]} {
    %c1_i32 = arith.constant 1 : i32
    %0 = arith.muli %arg0, %c1_i32 : i32
    %c0_i32 = arith.constant 0 : i32
    %1 = arith.addi %0, %c0_i32 : i32
    %c1_i32_0 = arith.constant 1 : i32
    %2 = arith.minsi %1, %c1_i32_0 : i32
    %c0_i32_1 = arith.constant 0 : i32
    %c8_i32 = arith.constant 8 : i32
    %3 = arith.addi %c0_i32_1, %c8_i32 : i32
    %c1_i32_2 = arith.constant 1 : i32
    scf.for %arg9 = %c0_i32_1 to %3 step %c1_i32_2  : i32 {
      %c1_i32_24 = arith.constant 1 : i32
      %43 = arith.muli %arg9, %c1_i32_24 : i32
      %c0_i32_25 = arith.constant 0 : i32
      %44 = arith.addi %c0_i32_25, %43 : i32
      %c8_i32_26 = arith.constant 8 : i32
      %45 = arith.muli %2, %c8_i32_26 : i32
      %46 = arith.addi %45, %44 : i32
      %47 = arith.index_cast %46 : i32 to index
      %48 = memref.load %arg1[%47] : memref<16xi32, #tpu.memory_space<smem>>
      %c0_i32_27 = arith.constant 0 : i32
      %c31_i32 = arith.constant 31 : i32
      %49 = arith.maxsi %c0_i32_27, %48 : i32
      %50 = arith.minsi %c31_i32, %49 : i32
      %c0_i32_28 = arith.constant 0 : i32
      %c0_i32_29 = arith.constant 0 : i32
      %c0_i32_30 = arith.constant 0 : i32
      %51 = tpu.memref_slice %arg5[%50, %c0_i32_30] : memref<32x128xf32, #tpu.memory_space<any>> -> memref<1x128xf32, #tpu.memory_space<any>>
      %52 = tpu.memref_squeeze %51 : memref<1x128xf32, #tpu.memory_space<any>> -> memref<128xf32, #tpu.memory_space<any>>
      %c0_i32_31 = arith.constant 0 : i32
      %53 = tpu.memref_slice %arg7[%c0_i32_28, %44, %c0_i32_31] : memref<1x8x128xf32, #tpu.memory_space<vmem>> -> memref<1x1x128xf32, #tpu.memory_space<vmem>>
      %54 = tpu.memref_squeeze %53 : memref<1x1x128xf32, #tpu.memory_space<vmem>> -> memref<128xf32, #tpu.memory_space<vmem>>
      %55 = tpu.memref_slice %arg8[%c0_i32_29] : memref<1x!tpu.dma_semaphore, #tpu.memory_space<semaphore_mem>> -> memref<1x!tpu.dma_semaphore, #tpu.memory_space<semaphore_mem>>
      %56 = tpu.memref_squeeze %55 : memref<1x!tpu.dma_semaphore, #tpu.memory_space<semaphore_mem>> -> memref<!tpu.dma_semaphore, #tpu.memory_space<semaphore_mem>>
      tpu.enqueue_dma source(%52 : memref<128xf32, #tpu.memory_space<any>>) target(%54 : memref<128xf32, #tpu.memory_space<vmem>>) target_semaphore(%56 : memref<!tpu.dma_semaphore, #tpu.memory_space<semaphore_mem>>)
    }
    %c8_i32_3 = arith.constant 8 : i32
    %c0_i32_4 = arith.constant 0 : i32
    %c8_i32_5 = arith.constant 8 : i32
    %4 = arith.addi %c0_i32_4, %c8_i32_5 : i32
    %c1_i32_6 = arith.constant 1 : i32
    scf.for %arg9 = %c0_i32_4 to %4 step %c1_i32_6  : i32 {
      %c0_i32_24 = arith.constant 0 : i32
      %c0_i32_25 = arith.constant 0 : i32
      %c0_i32_26 = arith.constant 0 : i32
      %c0_i32_27 = arith.constant 0 : i32
      %c0_i32_28 = arith.constant 0 : i32
      %43 = tpu.memref_slice %arg5[%c0_i32_24, %c0_i32_28] : memref<32x128xf32, #tpu.memory_space<any>> -> memref<1x128xf32, #tpu.memory_space<any>>
      %44 = tpu.memref_squeeze %43 : memref<1x128xf32, #tpu.memory_space<any>> -> memref<128xf32, #tpu.memory_space<any>>
      %c0_i32_29 = arith.constant 0 : i32
      %45 = tpu.memref_slice %arg7[%c0_i32_25, %c0_i32_26, %c0_i32_29] : memref<1x8x128xf32, #tpu.memory_space<vmem>> -> memref<1x1x128xf32, #tpu.memory_space<vmem>>
      %46 = tpu.memref_squeeze %45 : memref<1x1x128xf32, #tpu.memory_space<vmem>> -> memref<128xf32, #tpu.memory_space<vmem>>
      %47 = tpu.memref_slice %arg8[%c0_i32_27] : memref<1x!tpu.dma_semaphore, #tpu.memory_space<semaphore_mem>> -> memref<1x!tpu.dma_semaphore, #tpu.memory_space<semaphore_mem>>
      %48 = tpu.memref_squeeze %47 : memref<1x!tpu.dma_semaphore, #tpu.memory_space<semaphore_mem>> -> memref<!tpu.dma_semaphore, #tpu.memory_space<semaphore_mem>>
      tpu.wait_dma2 semaphore(%48 : memref<!tpu.dma_semaphore, #tpu.memory_space<semaphore_mem>>) src(%44 : memref<128xf32, #tpu.memory_space<any>>) dst(%46 : memref<128xf32, #tpu.memory_space<vmem>>)
    }
    %c0 = arith.constant 0 : index
    %c0_7 = arith.constant 0 : index
    %5 = vector.load %arg2[%c0, %c0_7] : memref<16x128xf32, #tpu.memory_space<vmem>>, vector<8x128xf32>
    %c0_8 = arith.constant 0 : index
    %c0_9 = arith.constant 0 : index
    %c0_10 = arith.constant 0 : index
    %6 = vector.load %arg7[%c0_8, %c0_9, %c0_10] : memref<1x8x128xf32, #tpu.memory_space<vmem>>, vector<1x8x128xf32>
    %7 = vector.shape_cast %5 : vector<8x128xf32> to vector<1x8x128xf32>
    %8 = arith.addf %6, %7 : vector<1x8x128xf32>
    %c0_11 = arith.constant 0 : index
    %c0_12 = arith.constant 0 : index
    %9 = vector.load %arg3[%c0_11, %c0_12] : memref<1x128xf32, #tpu.memory_space<vmem>>, vector<1x128xf32>
    %c0_13 = arith.constant 0 : index
    %c0_14 = arith.constant 0 : index
    %10 = vector.load %arg4[%c0_13, %c0_14] : memref<1x128xf32, #tpu.memory_space<vmem>>, vector<1x128xf32>
    %cst = arith.constant dense<0.000000e+00> : vector<1x8xf32>
    %11 = vector.multi_reduction <add>, %8, %cst [2] : vector<1x8x128xf32> to vector<1x8xf32>
    %12 = vector.shape_cast %11 : vector<1x8xf32> to vector<1x8x1xf32>
    %13 = arith.mulf %8, %8 : vector<1x8x128xf32>
    %cst_15 = arith.constant dense<0.000000e+00> : vector<1x8xf32>
    %14 = vector.multi_reduction <add>, %13, %cst_15 [2] : vector<1x8x128xf32> to vector<1x8xf32>
    %15 = vector.shape_cast %14 : vector<1x8xf32> to vector<1x8x1xf32>
    %cst_16 = arith.constant 7.812500e-03 : f32
    %16 = vector.broadcast %cst_16 : f32 to vector<1x8x1xf32>
    %17 = arith.mulf %12, %16 : vector<1x8x1xf32>
    %18 = arith.mulf %12, %17 : vector<1x8x1xf32>
    %19 = arith.subf %15, %18 : vector<1x8x1xf32>
    %cst_17 = arith.constant 0.00787401571 : f32
    %20 = vector.broadcast %cst_17 : f32 to vector<1x8x1xf32>
    %21 = arith.mulf %19, %20 : vector<1x8x1xf32>
    %cst_18 = arith.constant 0.000000e+00 : f32
    %22 = vector.broadcast %cst_18 : f32 to vector<1x8x1xf32>
    %23 = arith.maximumf %21, %22 : vector<1x8x1xf32>
    %24 = math.sqrt %23 : vector<1x8x1xf32>
    %cst_19 = arith.constant 9.99999997E-7 : f32
    %25 = vector.broadcast %cst_19 : f32 to vector<1x8x1xf32>
    %26 = arith.addf %24, %25 : vector<1x8x1xf32>
    %27 = tpu.reciprocal %26 {approx = true} : vector<1x8x1xf32> -> vector<1x8x1xf32>
    %28 = arith.mulf %26, %27 : vector<1x8x1xf32>
    %cst_20 = arith.constant 2.000000e+00 : f32
    %29 = vector.broadcast %cst_20 : f32 to vector<1x8x1xf32>
    %30 = arith.subf %29, %28 : vector<1x8x1xf32>
    %31 = arith.mulf %27, %30 : vector<1x8x1xf32>
    %32 = vector.broadcast %17 : vector<1x8x1xf32> to vector<1x8x128xf32>
    %33 = arith.subf %8, %32 : vector<1x8x128xf32>
    %34 = vector.broadcast %31 : vector<1x8x1xf32> to vector<1x8x128xf32>
    %35 = arith.mulf %33, %34 : vector<1x8x128xf32>
    %36 = vector.shape_cast %9 : vector<1x128xf32> to vector<1x1x128xf32>
    %37 = vector.broadcast %36 : vector<1x1x128xf32> to vector<1x8x128xf32>
    %38 = arith.mulf %37, %35 : vector<1x8x128xf32>
    %39 = vector.shape_cast %10 : vector<1x128xf32> to vector<1x1x128xf32>
    %40 = vector.broadcast %39 : vector<1x1x128xf32> to vector<1x8x128xf32>
    %41 = arith.addf %38, %40 : vector<1x8x128xf32>
    %c0_21 = arith.constant 0 : index
    %c0_22 = arith.constant 0 : index
    %c0_23 = arith.constant 0 : index
    %42 = vector.load %arg6[%c0_21, %c0_22, %c0_23] : memref<1x8x128xf32, #tpu.memory_space<vmem>>, vector<1x8x128xf32>
    tpu.vector_store %arg6[%c0_21, %c0_22, %c0_23], %41 {strides = array<i32>} : memref<1x8x128xf32, #tpu.memory_space<vmem>>, vector<1x8x128xf32>,
    return
  }
  func.func @transform_0(%arg0: i32, %arg1: memref<16xi32, #tpu.memory_space<smem>>) -> (i32, i32) {
    %c0_i32 = arith.constant 0 : i32
    %c0_i32_0 = arith.constant 0 : i32
    %c0_i32_1 = arith.constant 0 : i32
    return %c0_i32, %c0_i32_0 : i32, i32
  }
  func.func @transform_1(%arg0: i32, %arg1: memref<16xi32, #tpu.memory_space<smem>>) -> (i32, i32) {
    %c0_i32 = arith.constant 0 : i32
    %c0_i32_0 = arith.constant 0 : i32
    %c0_i32_1 = arith.constant 0 : i32
    return %c0_i32, %c0_i32_0 : i32, i32
  }
  func.func @transform_2(%arg0: i32, %arg1: memref<16xi32, #tpu.memory_space<smem>>) -> (i32, i32) {
    %c0_i32 = arith.constant 0 : i32
    %c0_i32_0 = arith.constant 0 : i32
    %c0_i32_1 = arith.constant 0 : i32
    return %c0_i32, %c0_i32_0 : i32, i32
  }
  func.func @transform_4(%arg0: i32, %arg1: memref<16xi32, #tpu.memory_space<smem>>) -> (i32, i32, i32) {
    %c0_i32 = arith.constant 0 : i32
    %c0_i32_0 = arith.constant 0 : i32
    %c0_i32_1 = arith.constant 0 : i32
    return %arg0, %c0_i32, %c0_i32_0 : i32, i32, i32
  }
}

</mosaic_0001>

<llo_original>
// kernel: tpu_custom_call.1
$region0: #{tpu_custom_call.1}
  #allocation0 [shape = 'u32[]', space=smem, size = 0x4, offset = 0x4, fixed_abs, tag = 'smem constant byte address 0x4 - core index']
  #allocation1 [shape = 'u32[144,128]{1,0:T(1,128)}', space=vmem, size = 0x12000, scoped, tag = 'internal scratch']
  #allocation2 [shape = 'f32[1,8,128]{2,1,0:T(8,128)}', space=vmem, size = 0x1000, scoped, tag = 'scratch operand']
  #allocation3 [shape = 's32[1]{0}', space=sflag, size = 0x4, scoped, tag = 'scratch operand']
  #allocation4 [shape = 's32[1]{0}', space=sflag, size = 0x4, scoped, tag = 'scoped memory for tpu_custom_call.1']
  #allocation5 [shape = 'u8[512]{0}', space=smem, size = 0x200, scoped, tag = 'prefetched SMEM operand 0']
  #allocation10 [shape = 's32[]', space=sflag, size = 0x4, offset = 0, fixed_abs, tag = 'sflag constant byte address 0x0 - dummy sync flag']
  #allocation11 [shape = 's32[]', space=sflag, size = 0x4, offset = 0, fixed_abs, tag = 'sflag constant byte address 0x0 - dummy sync flag']
  #allocation12 [shape = 'u32[]', space=smem, size = 0x4, offset = 0x44, fixed_abs, tag = 'smem constant byte address 0x44 - assertion arg 0']
  #allocation13 [shape = 'u32[]', space=smem, size = 0x4, offset = 0x48, fixed_abs, tag = 'smem constant byte address 0x48 - assertion arg 1']
  %s0 = inlined_call_operand.hbm [shape: s32[16], index: 0, kind: input, shape index: {}]
  %s1 = inlined_call_operand.hbm [shape: f32[16,128], index: 1, kind: input, shape index: {}]
  %s2 = inlined_call_operand.vmem [shape: f32[1,128], index: 2, kind: input, shape index: {}]
  %s3 = inlined_call_operand.vmem [shape: f32[1,128], index: 3, kind: input, shape index: {}]
  %s4 = inlined_call_operand.hbm [shape: f32[32,128], index: 4, kind: input, shape index: {}]
  %s5 = inlined_call_operand.hbm [shape: f32[2,8,128], index: 5, kind: output, shape index: {}]
  %s6 = sld [smem:[#allocation0]]
  $region67: #{tpu_custom_call.1} parent=0
    _
  %s8 = ssub.s32 1, %s6
  %s9 = scalar_select 0, %s8, %s6
  %11 = dma.hbm_to_smem %s0, 16, [#allocation5], [#allocation4]
  %12 = dma.done [#allocation4], 16
  %13 = sfence
  $region1: #{tpu_custom_call.1} parent=0
    #allocation6 [shape = 'u8[8192]{0}', space=vmem, size = 0x2000, scoped, tag = 'input window, operand 1, single buffered']
    #allocation7 [shape = 's32[2]{0}', space=sflag, size = 0x8, scoped, tag = 'scoped memory for tpu_custom_call.1']
    #allocation8 [shape = 's32[2]{0}', space=sflag, size = 0x8, scoped, tag = 'scoped memory for tpu_custom_call.1']
    #allocation9 [shape = 'u8[8192]{0}', space=vmem, size = 0x2000, scoped, tag = 'output window, operand 0']
    %14 = vsyncpa [#allocation7], 0
    %15 = vsyncpa [#allocation8], 0
    %s16 = scalar_lea.sflag [#allocation8], 1
    %17 = vsyncpa %s16, 0
    loop: start=0, step=1, limit=4
    $region2: #{tpu_custom_call.1} parent=1 // loop_pre_header
      _
    $region3: #{tpu_custom_call.1} parent=1 // loop_header
      %s19 = sphi 0, %s23
      %p20 = scmp.ge.s32.totalorder %s19, 4
      %s27 = sphi 0, %s27
      %s29 = sphi 0, %s27
      %s30 = sphi 0, %s29
      %s44 = sphi 0, %s30
      %s48 = sphi 0, %s48
      %s50 = sphi 0, %s48
      %s51 = sphi 0, %s50
      %s65 = sphi 0, %s51
      %s69 = sphi 0, %s69
      %s71 = sphi 0, %s69
      %s72 = sphi 0, %s71
      %s86 = sphi 0, %s72
      %s92 = sphi 0, %s94
      %s95 = sphi 0, %s92
      %s96 = sphi 0, %s95
      %s112 = sphi 0, %s96
    $region4: #{tpu_custom_call.1} parent=1 // loop_header_branch
      %22 = sbr.rel (%p20) target = $region8
    $region5: #{tpu_custom_call.1} parent=1 // loop_body
      %s24 = ssub.s32 %s19, 1
      %s25 = ssub.s32 %s19, 2
      %s26 = sadd.s32 %s19, 1
      %s28 = sadd.s32 %s27, 1
      %p31 = scmp.eq.s32.totalorder %s19, 1
      %p32 = scmp.ne.s32.totalorder %s27, %s29
      %p33 = scmp.eq.s32.totalorder %s19, 0
      %p34 = por %p32, %p33
      %p35 = scmp.ne.s32.totalorder %s27, %s29
      %p36 = scmp.eq.s32.totalorder %s24, 1
      %p37 = por %p35, %p36
      %p38 = scmp.ne.s32.totalorder %s29, %s30
      %p39 = scmp.eq.s32.totalorder %s24, 0
      %p40 = por %p38, %p39
      %p41 = scmp.ne.s32.totalorder %s29, %s30
      %p42 = scmp.eq.s32.totalorder %s25, 1
      %p43 = por %p41, %p42
      %p45 = scmp.ne.s32.totalorder %s30, %s44
      %p46 = scmp.eq.s32.totalorder %s25, 0
      %p47 = por %p45, %p46
      %s49 = sadd.s32 %s48, 1
      %p52 = scmp.eq.s32.totalorder %s19, 1
      %p53 = scmp.ne.s32.totalorder %s48, %s50
      %p54 = scmp.eq.s32.totalorder %s19, 0
      %p55 = por %p53, %p54
      %p56 = scmp.ne.s32.totalorder %s48, %s50
      %p57 = scmp.eq.s32.totalorder %s24, 1
      %p58 = por %p56, %p57
      %p59 = scmp.ne.s32.totalorder %s50, %s51
      %p60 = scmp.eq.s32.totalorder %s24, 0
      %p61 = por %p59, %p60
      %p62 = scmp.ne.s32.totalorder %s50, %s51
      %p63 = scmp.eq.s32.totalorder %s25, 1
      %p64 = por %p62, %p63
      %p66 = scmp.ne.s32.totalorder %s51, %s65
      %p67 = scmp.eq.s32.totalorder %s25, 0
      %p68 = por %p66, %p67
      %s70 = sadd.s32 %s69, 1
      %p73 = scmp.eq.s32.totalorder %s19, 1
      %p74 = scmp.ne.s32.totalorder %s69, %s71
      %p75 = scmp.eq.s32.totalorder %s19, 0
      %p76 = por %p74, %p75
      %p77 = scmp.ne.s32.totalorder %s69, %s71
      %p78 = scmp.eq.s32.totalorder %s24, 1
      %p79 = por %p77, %p78
      %p80 = scmp.ne.s32.totalorder %s71, %s72
      %p81 = scmp.eq.s32.totalorder %s24, 0
      %p82 = por %p80, %p81
      %p83 = scmp.ne.s32.totalorder %s71, %s72
      %p84 = scmp.eq.s32.totalorder %s25, 1
      %p85 = por %p83, %p84
      %p87 = scmp.ne.s32.totalorder %s72, %s86
      %p88 = scmp.eq.s32.totalorder %s25, 0
      %p89 = por %p87, %p88
      %s90 = ssub.s32 %s19, %s26
      %p91 = scmp.eq.s32.totalorder %s90, 0
      %s93 = sadd.s32 %s92, 1
      %s94 = scalar_select %p91, %s92, %s93
      %p97 = pneg %p91
      %p98 = scmp.eq.s32.totalorder %s19, 1
      %p99 = por %p97, %p98
      %p100 = scmp.ne.s32.totalorder %s92, %s95
      %p101 = scmp.eq.s32.totalorder %s19, 0
      %p102 = por %p100, %p101
      %p103 = scmp.ne.s32.totalorder %s92, %s95
      %p104 = scmp.eq.s32.totalorder %s24, 1
      %p105 = por %p103, %p104
      %p106 = scmp.ne.s32.totalorder %s95, %s96
      %p107 = scmp.eq.s32.totalorder %s24, 0
      %p108 = por %p106, %p107
      %p109 = scmp.ne.s32.totalorder %s95, %s96
      %p110 = scmp.eq.s32.totalorder %s25, 1
      %p111 = por %p109, %p110
      %p113 = scmp.ne.s32.totalorder %s96, %s112
      %p114 = scmp.eq.s32.totalorder %s25, 0
      %p115 = por %p113, %p114
      %p116 = scmp.le.s32.totalorder 1, %s19
      %p117 = scmp.lt.s32.totalorder %s19, 3
      %p118 = pnand %p116, %p117
      %p119 = pneg %p118
      // Predicated region
      $region9: #{tpu_custom_call.1} parent=5 // pred_check
        _
      $region10: #{tpu_custom_call.1} parent=5 // pred_check_branch
        %121 = sbr.rel (%p118) target = $region12
      $region11: #{tpu_custom_call.1} parent=5 // pred_region
        %s122 = ssub.s32 %s19, 1
        // Predicated region
        $region13: #{tpu_custom_call.1} parent=11 // pred_check
          %p123 = pneg %p40
        $region14: #{tpu_custom_call.1} parent=11 // pred_check_branch
          %125 = sbr.rel (%p123) target = $region16
        $region15: #{tpu_custom_call.1} parent=11 // pred_region
          %s127 = ssub.s32 256, 256
          %128 = vsyncadd [#allocation7], %s127
          %s129 = sshll.u32 [#allocation6], 4
          %s130 = int_to_ptr.vmem [resolvable:$true] %s129
          %135 = dma.hbm_to_vmem [thread:$0]  %s1, 256, %s130, [#allocation7], 128, 128, 8
        $region16: #{tpu_custom_call.1} parent=11 // pred_fallthru
          _
        // Predicated region
        $region17: #{tpu_custom_call.1} parent=11 // pred_check
          %p136 = pneg %p61
        $region18: #{tpu_custom_call.1} parent=11 // pred_check_branch
          %138 = sbr.rel (%p136) target = $region20
        $region19: #{tpu_custom_call.1} parent=11 // pred_region
          _
        $region20: #{tpu_custom_call.1} parent=11 // pred_fallthru
          _
        // Predicated region
        $region21: #{tpu_custom_call.1} parent=11 // pred_check
          %p139 = pneg %p82
        $region22: #{tpu_custom_call.1} parent=11 // pred_check_branch
          %141 = sbr.rel (%p139) target = $region24
        $region23: #{tpu_custom_call.1} parent=11 // pred_region
          _
        $region24: #{tpu_custom_call.1} parent=11 // pred_fallthru
          _
      $region12: #{tpu_custom_call.1} parent=5 // pred_fallthru
        _
      %p142 = scmp.lt.s32.totalorder %s19, 2
      // Predicated region
      $region25: #{tpu_custom_call.1} parent=5 // pred_check
        %p143 = pneg %p142
      $region26: #{tpu_custom_call.1} parent=5 // pred_check_branch
        %145 = sbr.rel (%p143) target = $region28
      $region27: #{tpu_custom_call.1} parent=5 // pred_region
        _
      $region28: #{tpu_custom_call.1} parent=5 // pred_fallthru
        _
      %p146 = scmp.le.s32.totalorder 1, %s19
      %p147 = scmp.lt.s32.totalorder %s19, 3
      %p148 = pnand %p146, %p147
      %p149 = pneg %p148
      // Predicated region
      $region29: #{tpu_custom_call.1} parent=5 // pred_check
        _
      $region30: #{tpu_custom_call.1} parent=5 // pred_check_branch
        %151 = sbr.rel (%p148) target = $region32
      $region31: #{tpu_custom_call.1} parent=5 // pred_region
        %s152 = ssub.s32 %s19, 1
        // Predicated region
        $region33: #{tpu_custom_call.1} parent=31 // pred_check
          %p153 = pneg %p40
        $region34: #{tpu_custom_call.1} parent=31 // pred_check_branch
          %155 = sbr.rel (%p153) target = $region36
        $region35: #{tpu_custom_call.1} parent=31 // pred_region
          %156 = dma.done [#allocation7], 256
        $region36: #{tpu_custom_call.1} parent=31 // pred_fallthru
          _
        %p157 = pneg %p40
        %p158 = pneg %p37
        %p159 = pneg %p61
        %p160 = pneg %p58
        %p161 = pneg %p82
        %p162 = pneg %p79
        %p163 = pneg %p108
        %p164 = pneg %p105
        %s165 = sand.u32 %s95, 1
        %s166 = scalar_lea.sflag [#allocation8], %s165
        %s167 = sand.u32 %s95, 1
        %s168 = smul.addr %s167, 8
        %s169 = scalar_lea.vmem [#allocation9], %s168
        %p170 = scmp.lt.s32.totalorder %s24, 1
        %s171 = scalar_select %p170, %s24, 1
        loop: start=0, step=1, limit=8
        $region37: #{tpu_custom_call.1} parent=31 // loop_pre_header
          _
        $region38: #{tpu_custom_call.1} parent=31 // loop_header
          %s173 = sphi 0, %s177
          %p174 = scmp.ge.s32.totalorder %s173, 8
        $region39: #{tpu_custom_call.1} parent=31 // loop_header_branch
          %176 = sbr.rel (%p174) target = $region43
        $region40: #{tpu_custom_call.1} parent=31 // loop_body
          %s178 = smul.u32 %s171, 8
          %s179 = sadd.s32 %s178, %s173
          %s180 = sld [smem:[#allocation5 + %s179]]
          %p181 = scmp.gt.s32.totalorder %s180, 0
          %s182 = scalar_select %p181, %s180, 0
          %p183 = scmp.lt.s32.totalorder %s182, 31
          %s184 = scalar_select %p183, %s182, 31
          %s185 = smul.addr %s184, 16
          %s186 = scalar_lea.hbm %s4, %s185
          %s187 = scalar_lea.vmem [#allocation2], %s173
          // Predicated region
          $region44: #{tpu_custom_call.1} parent=40 // pred_check
            _
          $region45: #{tpu_custom_call.1} parent=40 // pred_check_branch
            %189 = sbr.rel target = $region47
          $region46: #{tpu_custom_call.1} parent=40 // pred_region
            %190 = sst [smem:[#allocation12]] [#allocation11]
            %191 = sst [smem:[#allocation13]] [#allocation10]
          $region47: #{tpu_custom_call.1} parent=40 // pred_fallthru
            _
          %193 = shalt.err (0)
          %s195 = sshll.u32 %s187, 4
          %s196 = int_to_ptr.vmem [resolvable:$true] %s195
          %198 = dma.hbm_to_vmem [thread:$0]  %s186, 16, %s196, [#allocation3]
        $region41: #{tpu_custom_call.1} parent=31 // loop_footer
          %s177 = sadd.s32 1, %s173
        $region42: #{tpu_custom_call.1} parent=31 // loop_footer_branch
          %172 = sbr.rel target = $region38
        $region43: #{tpu_custom_call.1} parent=31 // loop_exit
          _
        loop: start=0, step=1, limit=8
        $region48: #{tpu_custom_call.1} parent=31 // loop_pre_header
          _
        $region49: #{tpu_custom_call.1} parent=31 // loop_header
          %s200 = sphi 0, %s204
          %p201 = scmp.ge.s32.totalorder %s200, 8
        $region50: #{tpu_custom_call.1} parent=31 // loop_header_branch
          %203 = sbr.rel (%p201) target = $region54
        $region51: #{tpu_custom_call.1} parent=31 // loop_body
          %206 = dma.done [#allocation3], 16
        $region52: #{tpu_custom_call.1} parent=31 // loop_footer
          %s204 = sadd.s32 1, %s200
        $region53: #{tpu_custom_call.1} parent=31 // loop_footer_branch
          %199 = sbr.rel target = $region49
        $region54: #{tpu_custom_call.1} parent=31 // loop_exit
          _
        %v207 = vld [vmem:[#allocation6] sm:$0xff]
        %v208 = vld [vmem:[#allocation2] sm:$0xff]
        %v209 = vadd.f32 %v208, %v207
        %v210 = vld [vmem:[%s2] sm:$0x1]
        %v211 = vld [vmem:[%s3] sm:$0x1]
        %212 = vadd.xlane.f32.xlu0 %v209
        %v213 = vpop.xlane.xlu0 %212
        %v214 = vmul.f32 %v209, %v209
        %215 = vadd.xlane.f32.xlu0 %v214
        %v216 = vpop.xlane.xlu0 %215
        %v217 = vmul.f32 %v213, 0.0078125
        %v218 = vmul.f32 %v213, %v217
        %v219 = vsub.f32 %v216, %v218
        %v220 = vmul.f32 %v219, 0.007874016
        %v221 = vmax.f32 %v220, 0.0
        %v222 = vrsqrt.pop %v221
        %v223 = vmul.f32 %v221, %v222
        %vm224 = vcmp.eq.f32.partialorder %v221, inf
        %v225 = vsel %vm224, %v221, %v223
        %vm226 = vcmp.eq.f32.partialorder %v221, 0.0
        %v227 = vand.u32 %v221, 2147483648
        %v228 = vsel %vm226, %v227, %v225
        %v229 = vadd.f32 %v228, 1e-06
        %v230 = vrcp.pop %v229
        %v231 = vmul.f32 %v229, %v230
        %v232 = vsub.f32 2.0, %v231
        %v233 = vmul.f32 %v230, %v232
        %v234 = vsub.f32 %v209, %v217
        %v235 = vmul.f32 %v234, %v233
        %v237 = vlaneseq
        %v238 = vshrl.u32 %v237, 7
        %v239 = vsub.s32 0, %v238
        %v240 = vrot.slane %v210, %v239
        %v242 = vmul.f32 %v240, %v235
        %v244 = vlaneseq
        %v245 = vshrl.u32 %v244, 7
        %v246 = vsub.s32 0, %v245
        %v247 = vrot.slane %v211, %v246
        %v249 = vadd.f32 %v242, %v247
        %250 = vst [vmem:[%s169] sm:$0xff] %v249
        %s251 = sand.u32 %s95, 1
        %s252 = scalar_lea.sflag [#allocation8], %s251
        %s253 = sand.u32 %s95, 1
        %s254 = smul.addr %s253, 8
        %s255 = scalar_lea.vmem [#allocation9], %s254
        // Predicated region
        $region55: #{tpu_custom_call.1} parent=31 // pred_check
          %p256 = pneg %p105
        $region56: #{tpu_custom_call.1} parent=31 // pred_check_branch
          %258 = sbr.rel (%p256) target = $region58
        $region57: #{tpu_custom_call.1} parent=31 // pred_region
          %s260 = ssub.s32 128, 128
          %261 = vsyncadd %s252, %s260
          %s262 = smul.addr %s24, 128
          %s263 = scalar_lea.hbm %s5, %s262
          %s265 = sshll.u32 %s255, 4
          %s266 = int_to_ptr.vmem [resolvable:$true] %s265
          %268 = dma.vmem_to_hbm [thread:$0]  %s266, 128, %s263, %s252
        $region58: #{tpu_custom_call.1} parent=31 // pred_fallthru
          _
      $region32: #{tpu_custom_call.1} parent=5 // pred_fallthru
        _
      %p269 = scmp.le.s32.totalorder 2, %s19
      // Predicated region
      $region59: #{tpu_custom_call.1} parent=5 // pred_check
        %p270 = pneg %p269
      $region60: #{tpu_custom_call.1} parent=5 // pred_check_branch
        %272 = sbr.rel (%p270) target = $region62
      $region61: #{tpu_custom_call.1} parent=5 // pred_region
        %s273 = ssub.s32 %s19, 2
        // Predicated region
        $region63: #{tpu_custom_call.1} parent=61 // pred_check
          %p274 = pneg %p111
        $region64: #{tpu_custom_call.1} parent=61 // pred_check_branch
          %276 = sbr.rel (%p274) target = $region66
        $region65: #{tpu_custom_call.1} parent=61 // pred_region
          %s277 = sand.u32 %s96, 1
          %s278 = scalar_lea.sflag [#allocation8], %s277
          %s279 = sand.u32 %s96, 1
          %s280 = smul.addr %s279, 8
          %s281 = scalar_lea.vmem [#allocation9], %s280
          %282 = dma.done %s278, 128
        $region66: #{tpu_custom_call.1} parent=61 // pred_fallthru
          _
      $region62: #{tpu_custom_call.1} parent=5 // pred_fallthru
        _
    $region6: #{tpu_custom_call.1} parent=1 // loop_footer
      %s23 = sadd.s32 1, %s19
    $region7: #{tpu_custom_call.1} parent=1 // loop_footer_branch
      %18 = sbr.rel target = $region3
    $region8: #{tpu_custom_call.1} parent=1 // loop_exit
      _
    %283 = vsyncpa [#allocation7], 1
    %s284 = scalar_lea.sflag [#allocation7], 1
    %285 = vsyncpa %s284, 1
    %286 = vsyncpa [#allocation8], 1
    %s287 = scalar_lea.sflag [#allocation8], 1
    %288 = vsyncpa %s287, 1
  %289 = vsyncmov [#allocation3]
  %s290 = vpop.sfrf %289
  %p291 = scmp.eq.s32.totalorder %s290, 0
  %p292 = pneg %p291
  %294 = shalt.err (%p292)

</llo_original>
